<compile_context>
chip_gen: v5e
topology: v5e:2x2
jax: 0.10.0
libtpu: 0.0.40
codegen_flags: <defaults>
</compile_context>

<pallas_src>
import functools

import jax
import jax.numpy as jnp
import numpy as np
from jax.experimental import pallas as pl
from jax.experimental.pallas import tpu as pltpu

EPS = 1e-5
KS = 4        # kernel_size
STRIDE = 2
PAD = 1


def _round_up(x, m):
    return ((x + m - 1) // m) * m


# --------------------------------------------------------------------------- #
# Pallas kernels
# --------------------------------------------------------------------------- #
def _mm_stats_kernel(colsT_ref, w_ref, yT_ref, psum_ref, pssq_ref):
    """Per (phase, m-tile): y^T = W_p^T @ cols_p^T plus raw per-channel moments."""
    y = jnp.dot(w_ref[0], colsT_ref[0],
                preferred_element_type=jnp.float32)            # (Cout, M_tile) f32
    yT_ref[0] = y
    psum_ref[0, 0] = jnp.sum(y, axis=1, keepdims=True)         # (Cout, 1)
    pssq_ref[0, 0] = jnp.sum(y * y, axis=1, keepdims=True)     # (Cout, 1)


def _bn_relu_kernel(yT_ref, scale_ref, shift_ref, out_ref):
    """Per (phase, m-tile): out = relu(y * scale + shift). Lane-dense stores."""
    z = yT_ref[0] * scale_ref[...] + shift_ref[...]
    out_ref[0] = jnp.maximum(z, 0.0)


# --------------------------------------------------------------------------- #
# pallas_call wrappers
# --------------------------------------------------------------------------- #
def _matmul_stats(colsT, wT, m_tile):
    P, K, M_pad = colsT.shape
    Cout = wT.shape[1]
    n_mt = M_pad // m_tile

    # VMEM budget: double-buffered cols / weight / output blocks (+ slack).
    step_bytes = (2 * K * m_tile * colsT.dtype.itemsize
                  + 2 * Cout * K * wT.dtype.itemsize
                  + 2 * Cout * m_tile * 4 + 4096)
    vmem_limit = int(min(64 << 20, max(16 << 20, 4 * step_bytes)))

    return pl.pallas_call(
        _mm_stats_kernel,
        out_shape=(
            jax.ShapeDtypeStruct((P, Cout, M_pad), jnp.float32),     # y^T
            jax.ShapeDtypeStruct((P, n_mt, Cout, 1), jnp.float32),   # partial sum
            jax.ShapeDtypeStruct((P, n_mt, Cout, 1), jnp.float32),   # partial sumsq
        ),
        grid_spec=pltpu.PrefetchScalarGridSpec(
            num_scalar_prefetch=0,
            grid=(P, n_mt),
            in_specs=[
                pl.BlockSpec((1, K, m_tile), lambda p, m: (p, 0, m)),
                pl.BlockSpec((1, Cout, K), lambda p, m: (p, 0, 0)),
            ],
            out_specs=[
                pl.BlockSpec((1, Cout, m_tile), lambda p, m: (p, 0, m)),
                pl.BlockSpec((1, 1, Cout, 1), lambda p, m: (p, m, 0, 0)),
                pl.BlockSpec((1, 1, Cout, 1), lambda p, m: (p, m, 0, 0)),
            ],
        ),
        compiler_params=pltpu.CompilerParams(
            dimension_semantics=("parallel", "parallel"),
            vmem_limit_bytes=vmem_limit,
        ),
    )(colsT, wT)


def _bn_relu(yT, scale, shift, m_tile):
    P, Cout, M_pad = yT.shape
    n_mt = M_pad // m_tile
    return pl.pallas_call(
        _bn_relu_kernel,
        out_shape=jax.ShapeDtypeStruct((P, Cout, M_pad), jnp.float32),
        grid_spec=pltpu.PrefetchScalarGridSpec(
            num_scalar_prefetch=0,
            grid=(P, n_mt),
            in_specs=[
                pl.BlockSpec((1, Cout, m_tile), lambda p, m: (p, 0, m)),
                pl.BlockSpec((Cout, 1), lambda p, m: (0, 0)),
                pl.BlockSpec((Cout, 1), lambda p, m: (0, 0)),
            ],
            out_specs=pl.BlockSpec((1, Cout, m_tile), lambda p, m: (p, 0, m)),
        ),
        compiler_params=pltpu.CompilerParams(
            dimension_semantics=("parallel", "parallel"),
        ),
    )(yT, scale, shift)


# --------------------------------------------------------------------------- #
# XLA-side data prep (phase decomposition)
# --------------------------------------------------------------------------- #
def _phase_cols(x, compute_dtype):
    """x (N, Cin, D, H, W) -> cols^T (8, 8*Cin, M), M = N*D*H*W.

    Phase (rd,rh,rw), tap (td,th,tw) reads the 1-padded input at offset
    (rd+td, rh+th, rw+tw); rows are tap-major / cin-minor.
    """
    N, Cin, D, H, W = x.shape
    M = N * D * H * W
    xt = jnp.transpose(x, (1, 0, 2, 3, 4)).astype(compute_dtype)   # (Cin,N,D,H,W)
    xp = jnp.pad(xt, ((0, 0), (0, 0), (1, 1), (1, 1), (1, 1)))
    phases = []
    for rd in range(2):
        for rh in range(2):
            for rw in range(2):
                taps = []
                for td in range(2):
                    for th in range(2):
                        for tw in range(2):
                            taps.append(xp[:, :,
                                           rd + td:rd + td + D,
                                           rh + th:rh + th + H,
                                           rw + tw:rw + tw + W])
                phases.append(jnp.stack(taps, axis=0).reshape(8 * Cin, M))
    return jnp.stack(phases, axis=0), M                            # (8, 8*Cin, M)


def _phase_weights(wt, compute_dtype):
    """ConvTranspose3d weight (Cin, Cout, 4,4,4) -> (8, Cout, 8*Cin).

    Phase (rd,rh,rw), tap (td,th,tw) uses kernel index (3-rd-2td, 3-rh-2th, 3-rw-2tw).
    """
    Cin, Cout = wt.shape[0], wt.shape[1]
    wt = wt.astype(compute_dtype)
    phases = []
    for rd in range(2):
        for rh in range(2):
            for rw in range(2):
                taps = []
                for td in range(2):
                    for th in range(2):
                        for tw in range(2):
                            taps.append(wt[:, :,
                                           3 - rd - 2 * td,
                                           3 - rh - 2 * th,
                                           3 - rw - 2 * tw])        # (Cin, Cout)
                wp = jnp.stack(taps, axis=0).reshape(8 * Cin, Cout)  # tap-major rows
                phases.append(wp.T)                                  # (Cout, 8*Cin)
    return jnp.stack(phases, axis=0)                                 # (8, Cout, 8*Cin)


# --------------------------------------------------------------------------- #
# Forward
# --------------------------------------------------------------------------- #
@functools.partial(jax.jit, static_argnames=("compute_dtype",))
def upcna_forward(x, wt, bias, gamma, beta, *, compute_dtype=jnp.bfloat16):
    del bias  # exactly cancelled by training-mode BatchNorm (batch-mean subtraction)
    N, Cin, D, H, W = x.shape
    Cout = wt.shape[1]

    colsT, M = _phase_cols(x, compute_dtype)      # (8, 8*Cin, M)
    wT = _phase_weights(wt, compute_dtype)        # (8, Cout, 8*Cin)

    # M tiling: lane-dense tiles (multiple of 128), zero-pad the tail if needed.
    m_tile = min(512, _round_up(M, 128))
    M_pad = _round_up(M, m_tile)
    if M_pad != M:
        colsT = jnp.pad(colsT, ((0, 0), (0, 0), (0, M_pad - M)))
    n_mt = M_pad // m_tile

    # Pass 1: matmul + per-tile raw moments (padded columns are exactly zero ->
    # they contribute nothing to sum / sumsq).
    yT, psum, pssq = _matmul_stats(colsT, wT, m_tile)
    psum = psum[..., 0]                            # (8, n_mt, Cout)
    pssq = pssq[..., 0]

    # Chan-style combine of per-tile moments (avoids E[y^2]-E[y]^2 cancellation
    # at the global level; padding handled via per-tile valid counts).
    cnt = jnp.full((n_mt,), float(m_tile), jnp.float32)
    cnt = cnt.at[-1].set(float(M - (n_mt - 1) * m_tile))
    cnt_b = cnt[None, :, None]
    tile_mean = psum / cnt_b
    tile_m2 = pssq - psum * tile_mean
    total = 8.0 * M
    mean = jnp.sum(psum, axis=(0, 1)) / total                              # (Cout,)
    m2 = jnp.sum(tile_m2 + cnt_b * (tile_mean - mean[None, None, :]) ** 2,
                 axis=(0, 1))
    var = jnp.maximum(m2 / total, 0.0)                                     # biased var

    scale = gamma * jax.lax.rsqrt(var + EPS)                               # (Cout,)
    shift = beta - mean * scale

    # Pass 2: normalize + affine + ReLU (memory-bound, lane-dense).
    zT = _bn_relu(yT, scale.reshape(Cout, 1).astype(jnp.float32),
                  shift.reshape(Cout, 1).astype(jnp.float32), m_tile)

    # Re-assemble the 8 phases into NCDHW (tiny vs the matmul; headed there anyway).
    zT = zT[:, :, :M]
    z = zT.reshape(2, 2, 2, Cout, N, D, H, W)
    z = jnp.transpose(z, (4, 3, 5, 0, 6, 1, 7, 2))
    return z.reshape(N, Cout, 2 * D, 2 * H, 2 * W)


# --------------------------------------------------------------------------- #
# Pure-JAX f32 reference (independent path: zero-dilate + pad + 64-tap conv)
# --------------------------------------------------------------------------- #
def _reference(x, wt, bias, gamma, beta):
    N, Cin, D, H, W = x.shape
    Cout = wt.shape[1]
    Do, Ho, Wo = 2 * D, 2 * H, 2 * W
    xcl = jnp.transpose(x, (0, 2, 3, 4, 1))
    xd = jnp.zeros((N, 2 * D - 1, 2 * H - 1, 2 * W - 1, Cin), x.dtype)
    xd = xd.at[:, ::2, ::2, ::2, :].set(xcl)
    xp = jnp.pad(xd, ((0, 0), (2, 2), (2, 2), (2, 2), (0, 0)))
    patches = []
    for a in range(KS):
        for b in range(KS):
            for c in range(KS):
                patches.append(xp[:, a:a + Do, b:b + Ho, c:c + Wo, :])
    cols = jnp.stack(patches, axis=4).reshape(N * Do * Ho * Wo, KS ** 3 * Cin)
    wflip = wt[:, :, ::-1, ::-1, ::-1]
    wmat = jnp.transpose(wflip, (2, 3, 4, 0, 1)).reshape(KS ** 3 * Cin, Cout)
    y = cols @ wmat + bias[None, :]
    mu = y.mean(axis=0, keepdims=True)
    var = ((y - mu) ** 2).mean(axis=0, keepdims=True)
    z = jnp.maximum(gamma * (y - mu) / jnp.sqrt(var + EPS) + beta, 0.0)
    return jnp.transpose(z.reshape(N, Do, Ho, Wo, Cout), (0, 4, 1, 2, 3))


# --------------------------------------------------------------------------- #
if __name__ == "__main__":
    def run_case(N, Cin, Cout, D, H, W, seed, random_affine):
        key = jax.random.PRNGKey(seed)
        kx, kw, kb, kg, kbe = jax.random.split(key, 5)
        x = jax.random.normal(kx, (N, Cin, D, H, W), dtype=jnp.float32)
        wt = 0.1 * jax.random.normal(kw, (Cin, Cout, KS, KS, KS), dtype=jnp.float32)
        bias = 0.1 * jax.random.normal(kb, (Cout,), dtype=jnp.float32)
        if random_affine:
            gamma = 1.0 + 0.1 * jax.random.normal(kg, (Cout,), dtype=jnp.float32)
            beta = 0.1 * jax.random.normal(kbe, (Cout,), dtype=jnp.float32)
        else:  # nn.BatchNorm3d defaults
            gamma = jnp.ones((Cout,), jnp.float32)
            beta = jnp.zeros((Cout,), jnp.float32)

        out = jax.block_until_ready(upcna_forward(x, wt, bias, gamma, beta))
        assert out.shape == (N, Cout, 2 * D, 2 * H, 2 * W)

        ref = _reference(x, wt, bias, gamma, beta)
        # bf16 MXU inputs (f32 accumulation) vs a full-f32 reference.
        np.testing.assert_allclose(np.asarray(out), np.asarray(ref),
                                   rtol=2e-2, atol=2e-2)

    # Multi-tile M path: M = 2*8^3 = 1024 -> two 512-lane tiles.
    run_case(2, 4, 8, 8, 8, 8, seed=0, random_affine=False)
    # Odd Cin + M-padding path: Cin=3 (K=24), M = 125 -> padded to 128.
    run_case(1, 3, 8, 5, 5, 5, seed=1, random_affine=True)

    print("KERNEL_OK")
</pallas_src>

<mosaic_0001>
module attributes {stable_mosaic.version = 11 : i64} {
  func.func @_mm_stats_kernel(%arg0: i32, %arg1: i32, %arg2: memref<1x32x512xbf16, #tpu.memory_space<vmem>>, %arg3: memref<1x8x32xbf16, #tpu.memory_space<vmem>>, %arg4: memref<1x8x512xf32, #tpu.memory_space<vmem>>, %arg5: memref<1x1x8x1xf32, #tpu.memory_space<vmem>>, %arg6: memref<1x1x8x1xf32, #tpu.memory_space<vmem>>) attributes {dimension_semantics = [#tpu.dimension_semantics<parallel>, #tpu.dimension_semantics<parallel>], iteration_bounds = array<i64: 8, 2>, scalar_prefetch = 0 : i64, scratch_operands = 0 : i64, tpu.core_type = #tpu.core_type<tc>, window_params = [{transform_indices = @transform_0, window_bounds = array<i64: 1, 32, 512>}, {transform_indices = @transform_1, window_bounds = array<i64: 1, 8, 32>}, {transform_indices = @transform_2, window_bounds = array<i64: 1, 8, 512>}, {transform_indices = @transform_3, window_bounds = array<i64: 1, 1, 8, 1>}, {transform_indices = @transform_4, window_bounds = array<i64: 1, 1, 8, 1>}]} {
    %c0 = arith.constant 0 : index
    %c0_0 = arith.constant 0 : index
    %c0_1 = arith.constant 0 : index
    %0 = vector.load %arg3[%c0, %c0_0, %c0_1] : memref<1x8x32xbf16, #tpu.memory_space<vmem>>, vector<1x8x32xbf16>
    %1 = vector.shape_cast %0 : vector<1x8x32xbf16> to vector<8x32xbf16>
    %c0_2 = arith.constant 0 : index
    %c0_3 = arith.constant 0 : index
    %c0_4 = arith.constant 0 : index
    %2 = vector.load %arg2[%c0_2, %c0_3, %c0_4] : memref<1x32x512xbf16, #tpu.memory_space<vmem>>, vector<1x32x512xbf16>
    %3 = vector.shape_cast %2 : vector<1x32x512xbf16> to vector<32x512xbf16>
    %cst = arith.constant dense<0.000000e+00> : vector<8x512xf32>
    %4 = tpu.matmul %1, %3, %cst {dimension_numbers = #tpu.dot_dimension_numbers<[1], [0], [0], [1], [0, 0, 1, 1], [], []>} : vector<8x32xbf16>, vector<32x512xbf16>, vector<8x512xf32> -> vector<8x512xf32>
    %c0_5 = arith.constant 0 : index
    %c0_6 = arith.constant 0 : index
    %c0_7 = arith.constant 0 : index
    %5 = vector.load %arg4[%c0_5, %c0_6, %c0_7] : memref<1x8x512xf32, #tpu.memory_space<vmem>>, vector<1x8x512xf32>
    %6 = vector.shape_cast %5 : vector<1x8x512xf32> to vector<8x512xf32>
    %7 = vector.shape_cast %4 : vector<8x512xf32> to vector<1x8x512xf32>
    tpu.vector_store %arg4[%c0_5, %c0_6, %c0_7], %7 {strides = array<i32>} : memref<1x8x512xf32, #tpu.memory_space<vmem>>, vector<1x8x512xf32>,
    %cst_8 = arith.constant dense<0.000000e+00> : vector<8xf32>
    %8 = vector.multi_reduction <add>, %4, %cst_8 [1] : vector<8x512xf32> to vector<8xf32>
    %9 = vector.shape_cast %8 : vector<8xf32> to vector<8x1xf32>
    %c0_9 = arith.constant 0 : index
    %c0_10 = arith.constant 0 : index
    %c0_11 = arith.constant 0 : index
    %c0_12 = arith.constant 0 : index
    %10 = vector.load %arg5[%c0_9, %c0_10, %c0_11, %c0_12] : memref<1x1x8x1xf32, #tpu.memory_space<vmem>>, vector<1x1x8x1xf32>
    %11 = vector.shape_cast %10 : vector<1x1x8x1xf32> to vector<8x1xf32>
    %12 = vector.shape_cast %9 : vector<8x1xf32> to vector<1x1x8x1xf32>
    tpu.vector_store %arg5[%c0_9, %c0_10, %c0_11, %c0_12], %12 {strides = array<i32>} : memref<1x1x8x1xf32, #tpu.memory_space<vmem>>, vector<1x1x8x1xf32>,
    %13 = arith.mulf %4, %4 : vector<8x512xf32>
    %cst_13 = arith.constant dense<0.000000e+00> : vector<8xf32>
    %14 = vector.multi_reduction <add>, %13, %cst_13 [1] : vector<8x512xf32> to vector<8xf32>
    %15 = vector.shape_cast %14 : vector<8xf32> to vector<8x1xf32>
    %c0_14 = arith.constant 0 : index
    %c0_15 = arith.constant 0 : index
    %c0_16 = arith.constant 0 : index
    %c0_17 = arith.constant 0 : index
    %16 = vector.load %arg6[%c0_14, %c0_15, %c0_16, %c0_17] : memref<1x1x8x1xf32, #tpu.memory_space<vmem>>, vector<1x1x8x1xf32>
    %17 = vector.shape_cast %16 : vector<1x1x8x1xf32> to vector<8x1xf32>
    %18 = vector.shape_cast %15 : vector<8x1xf32> to vector<1x1x8x1xf32>
    tpu.vector_store %arg6[%c0_14, %c0_15, %c0_16, %c0_17], %18 {strides = array<i32>} : memref<1x1x8x1xf32, #tpu.memory_space<vmem>>, vector<1x1x8x1xf32>,
    return
  }
  func.func @transform_0(%arg0: i32, %arg1: i32) -> (i32, i32, i32) {
    %c0_i32 = arith.constant 0 : i32
    %c0_i32_0 = arith.constant 0 : i32
    return %arg0, %c0_i32, %arg1 : i32, i32, i32
  }
  func.func @transform_1(%arg0: i32, %arg1: i32) -> (i32, i32, i32) {
    %c0_i32 = arith.constant 0 : i32
    %c0_i32_0 = arith.constant 0 : i32
    %c0_i32_1 = arith.constant 0 : i32
    return %arg0, %c0_i32, %c0_i32_0 : i32, i32, i32
  }
  func.func @transform_2(%arg0: i32, %arg1: i32) -> (i32, i32, i32) {
    %c0_i32 = arith.constant 0 : i32
    %c0_i32_0 = arith.constant 0 : i32
    return %arg0, %c0_i32, %arg1 : i32, i32, i32
  }
  func.func @transform_3(%arg0: i32, %arg1: i32) -> (i32, i32, i32, i32) {
    %c0_i32 = arith.constant 0 : i32
    %c0_i32_0 = arith.constant 0 : i32
    %c0_i32_1 = arith.constant 0 : i32
    return %arg0, %arg1, %c0_i32, %c0_i32_0 : i32, i32, i32, i32
  }
  func.func @transform_4(%arg0: i32, %arg1: i32) -> (i32, i32, i32, i32) {
    %c0_i32 = arith.constant 0 : i32
    %c0_i32_0 = arith.constant 0 : i32
    %c0_i32_1 = arith.constant 0 : i32
    return %arg0, %arg1, %c0_i32, %c0_i32_0 : i32, i32, i32, i32
  }
}

module attributes {stable_mosaic.version = 11 : i64} {
  func.func @_bn_relu_kernel(%arg0: i32, %arg1: i32, %arg2: memref<1x8x512xf32, #tpu.memory_space<vmem>>, %arg3: memref<8x1xf32, #tpu.memory_space<vmem>>, %arg4: memref<8x1xf32, #tpu.memory_space<vmem>>, %arg5: memref<1x8x512xf32, #tpu.memory_space<vmem>>) attributes {dimension_semantics = [#tpu.dimension_semantics<parallel>, #tpu.dimension_semantics<parallel>], iteration_bounds = array<i64: 8, 2>, scalar_prefetch = 0 : i64, scratch_operands = 0 : i64, tpu.core_type = #tpu.core_type<tc>, window_params = [{transform_indices = @transform_0, window_bounds = array<i64: 1, 8, 512>}, {pipeline_mode = #tpu.pipeline_mode<synchronous>, transform_indices = @transform_1, window_bounds = array<i64: 8, 1>}, {pipeline_mode = #tpu.pipeline_mode<synchronous>, transform_indices = @transform_2, window_bounds = array<i64: 8, 1>}, {transform_indices = @transform_3, window_bounds = array<i64: 1, 8, 512>}]} {
    %c0 = arith.constant 0 : index
    %c0_0 = arith.constant 0 : index
    %c0_1 = arith.constant 0 : index
    %0 = vector.load %arg2[%c0, %c0_0, %c0_1] : memref<1x8x512xf32, #tpu.memory_space<vmem>>, vector<1x8x512xf32>
    %1 = vector.shape_cast %0 : vector<1x8x512xf32> to vector<8x512xf32>
    %c0_2 = arith.constant 0 : index
    %c0_3 = arith.constant 0 : index
    %2 = vector.load %arg3[%c0_2, %c0_3] : memref<8x1xf32, #tpu.memory_space<vmem>>, vector<8x1xf32>
    %3 = vector.broadcast %2 : vector<8x1xf32> to vector<8x512xf32>
    %4 = arith.mulf %1, %3 : vector<8x512xf32>
    %c0_4 = arith.constant 0 : index
    %c0_5 = arith.constant 0 : index
    %5 = vector.load %arg4[%c0_4, %c0_5] : memref<8x1xf32, #tpu.memory_space<vmem>>, vector<8x1xf32>
    %6 = vector.broadcast %5 : vector<8x1xf32> to vector<8x512xf32>
    %7 = arith.addf %4, %6 : vector<8x512xf32>
    %cst = arith.constant 0.000000e+00 : f32
    %8 = vector.broadcast %cst : f32 to vector<8x512xf32>
    %9 = arith.maximumf %7, %8 : vector<8x512xf32>
    %c0_6 = arith.constant 0 : index
    %c0_7 = arith.constant 0 : index
    %c0_8 = arith.constant 0 : index
    %10 = vector.load %arg5[%c0_6, %c0_7, %c0_8] : memref<1x8x512xf32, #tpu.memory_space<vmem>>, vector<1x8x512xf32>
    %11 = vector.shape_cast %10 : vector<1x8x512xf32> to vector<8x512xf32>
    %12 = vector.shape_cast %9 : vector<8x512xf32> to vector<1x8x512xf32>
    tpu.vector_store %arg5[%c0_6, %c0_7, %c0_8], %12 {strides = array<i32>} : memref<1x8x512xf32, #tpu.memory_space<vmem>>, vector<1x8x512xf32>,
    return
  }
  func.func @transform_0(%arg0: i32, %arg1: i32) -> (i32, i32, i32) {
    %c0_i32 = arith.constant 0 : i32
    %c0_i32_0 = arith.constant 0 : i32
    return %arg0, %c0_i32, %arg1 : i32, i32, i32
  }
  func.func @transform_1(%arg0: i32, %arg1: i32) -> (i32, i32) {
    %c0_i32 = arith.constant 0 : i32
    %c0_i32_0 = arith.constant 0 : i32
    %c0_i32_1 = arith.constant 0 : i32
    return %c0_i32, %c0_i32_0 : i32, i32
  }
  func.func @transform_2(%arg0: i32, %arg1: i32) -> (i32, i32) {
    %c0_i32 = arith.constant 0 : i32
    %c0_i32_0 = arith.constant 0 : i32
    %c0_i32_1 = arith.constant 0 : i32
    return %c0_i32, %c0_i32_0 : i32, i32
  }
  func.func @transform_3(%arg0: i32, %arg1: i32) -> (i32, i32, i32) {
    %c0_i32 = arith.constant 0 : i32
    %c0_i32_0 = arith.constant 0 : i32
    return %arg0, %c0_i32, %arg1 : i32, i32, i32
  }
}

</mosaic_0001>

<llo_original>
// kernel: upcna_forward.2
$region0: #{upcna_forward.2}
  #allocation0 [shape = 'u32[]', space=smem, size = 0x4, offset = 0x4, fixed_abs, tag = 'smem constant byte address 0x4 - core index']
  #allocation1 [shape = 'u32[72,128]{1,0:T(1,128)}', space=vmem, size = 0x9000, scoped, tag = 'internal scratch']
  %s0 = inlined_call_operand.vmem [shape: bf16[8,32,1024], index: 0, kind: input, shape index: {}]
  %s1 = inlined_call_operand.vmem [shape: bf16[8,8,32], index: 1, kind: input, shape index: {}]
  %s2 = inlined_call_operand.vmem [shape: f32[8,8,1024], index: 2, kind: output, shape index: {0}]
  %s3 = inlined_call_operand.vmem [shape: f32[8,2,8,1], index: 3, kind: output, shape index: {1}]
  %s4 = inlined_call_operand.vmem [shape: f32[8,2,8,1], index: 4, kind: output, shape index: {2}]
  %5 = xla_tuple %s2, %s3, %s4
  %s6 = sld [smem:[#allocation0]]
  $region80: #{upcna_forward.2} parent=0
    _
  %s8 = ssub.s32 1, %s6
  %s9 = scalar_select 0, %s8, %s6
  $region1: #{upcna_forward.2} parent=0
    #allocation2 [shape = 'u8[65536]{0}', space=vmem, size = 0x10000, scoped, tag = 'input window, operand 0']
    loop: start=0, step=1, limit=18
    $region2: #{upcna_forward.2} parent=1 // loop_pre_header
      _
    $region3: #{upcna_forward.2} parent=1 // loop_header
      %s11 = sphi 0, %s15
      %p12 = scmp.ge.s32.totalorder %s11, 18
      %s18 = sphi 0, %s30
      %s19 = sphi 0, %s26
      %s20 = sphi 0, %s18
      %s21 = sphi 0, %s19
      %s22 = sphi 0, %s20
      %s23 = sphi 0, %s21
      %s35 = sphi 0, %s37
      %s38 = sphi 0, %s35
      %s39 = sphi 0, %s38
      %s55 = sphi 0, %s39
      %s61 = sphi 0, %s63
      %s64 = sphi 0, %s61
      %s65 = sphi 0, %s64
      %s81 = sphi 0, %s65
      %s89 = sphi 0, %s91
      %s92 = sphi 0, %s89
      %s93 = sphi 0, %s92
      %s109 = sphi 0, %s93
      %s117 = sphi 0, %s119
      %s120 = sphi 0, %s117
      %s121 = sphi 0, %s120
      %s137 = sphi 0, %s121
      %s145 = sphi 0, %s147
      %s148 = sphi 0, %s145
      %s149 = sphi 0, %s148
      %s165 = sphi 0, %s149
    $region4: #{upcna_forward.2} parent=1 // loop_header_branch
      %14 = sbr.rel (%p12) target = $region8
    $region5: #{upcna_forward.2} parent=1 // loop_body
      %s16 = ssub.s32 %s11, 1
      %s17 = ssub.s32 %s11, 2
      %s24 = sadd.s32 1, %s19
      %p25 = scmp.ge.s32.totalorder %s24, 2
      %s26 = scalar_select %p25, 0, %s24
      %s27 = sadd.s32 1, %s18
      %s28 = scalar_select %p25, %s27, %s18
      %p29 = scmp.ge.s32.totalorder %s28, 8
      %s30 = scalar_select %p29, 0, %s28
      %s31 = ssub.s32 %s18, %s30
      %s32 = ssub.s32 %s19, %s26
      %s33 = sor.u32 %s31, %s32
      %p34 = scmp.eq.s32.totalorder %s33, 0
      %s36 = sadd.s32 %s35, 1
      %s37 = scalar_select %p34, %s35, %s36
      %p40 = pneg %p34
      %p41 = scmp.eq.s32.totalorder %s11, 15
      %p42 = por %p40, %p41
      %p43 = scmp.ne.s32.totalorder %s35, %s38
      %p44 = scmp.eq.s32.totalorder %s11, 0
      %p45 = por %p43, %p44
      %p46 = scmp.ne.s32.totalorder %s35, %s38
      %p47 = scmp.eq.s32.totalorder %s16, 15
      %p48 = por %p46, %p47
      %p49 = scmp.ne.s32.totalorder %s38, %s39
      %p50 = scmp.eq.s32.totalorder %s16, 0
      %p51 = por %p49, %p50
      %p52 = scmp.ne.s32.totalorder %s38, %s39
      %p53 = scmp.eq.s32.totalorder %s17, 15
      %p54 = por %p52, %p53
      %p56 = scmp.ne.s32.totalorder %s39, %s55
      %p57 = scmp.eq.s32.totalorder %s17, 0
      %p58 = por %p56, %p57
      %s59 = ssub.s32 %s18, %s30
      %p60 = scmp.eq.s32.totalorder %s59, 0
      %s62 = sadd.s32 %s61, 1
      %s63 = scalar_select %p60, %s61, %s62
      %p66 = pneg %p60
      %p67 = scmp.eq.s32.totalorder %s11, 15
      %p68 = por %p66, %p67
      %p69 = scmp.ne.s32.totalorder %s61, %s64
      %p70 = scmp.eq.s32.totalorder %s11, 0
      %p71 = por %p69, %p70
      %p72 = scmp.ne.s32.totalorder %s61, %s64
      %p73 = scmp.eq.s32.totalorder %s16, 15
      %p74 = por %p72, %p73
      %p75 = scmp.ne.s32.totalorder %s64, %s65
      %p76 = scmp.eq.s32.totalorder %s16, 0
      %p77 = por %p75, %p76
      %p78 = scmp.ne.s32.totalorder %s64, %s65
      %p79 = scmp.eq.s32.totalorder %s17, 15
      %p80 = por %p78, %p79
      %p82 = scmp.ne.s32.totalorder %s65, %s81
      %p83 = scmp.eq.s32.totalorder %s17, 0
      %p84 = por %p82, %p83
      %s85 = ssub.s32 %s18, %s30
      %s86 = ssub.s32 %s19, %s26
      %s87 = sor.u32 %s85, %s86
      %p88 = scmp.eq.s32.totalorder %s87, 0
      %s90 = sadd.s32 %s89, 1
      %s91 = scalar_select %p88, %s89, %s90
      %p94 = pneg %p88
      %p95 = scmp.eq.s32.totalorder %s11, 15
      %p96 = por %p94, %p95
      %p97 = scmp.ne.s32.totalorder %s89, %s92
      %p98 = scmp.eq.s32.totalorder %s11, 0
      %p99 = por %p97, %p98
      %p100 = scmp.ne.s32.totalorder %s89, %s92
      %p101 = scmp.eq.s32.totalorder %s16, 15
      %p102 = por %p100, %p101
      %p103 = scmp.ne.s32.totalorder %s92, %s93
      %p104 = scmp.eq.s32.totalorder %s16, 0
      %p105 = por %p103, %p104
      %p106 = scmp.ne.s32.totalorder %s92, %s93
      %p107 = scmp.eq.s32.totalorder %s17, 15
      %p108 = por %p106, %p107
      %p110 = scmp.ne.s32.totalorder %s93, %s109
      %p111 = scmp.eq.s32.totalorder %s17, 0
      %p112 = por %p110, %p111
      %s113 = ssub.s32 %s18, %s30
      %s114 = ssub.s32 %s19, %s26
      %s115 = sor.u32 %s113, %s114
      %p116 = scmp.eq.s32.totalorder %s115, 0
      %s118 = sadd.s32 %s117, 1
      %s119 = scalar_select %p116, %s117, %s118
      %p122 = pneg %p116
      %p123 = scmp.eq.s32.totalorder %s11, 15
      %p124 = por %p122, %p123
      %p125 = scmp.ne.s32.totalorder %s117, %s120
      %p126 = scmp.eq.s32.totalorder %s11, 0
      %p127 = por %p125, %p126
      %p128 = scmp.ne.s32.totalorder %s117, %s120
      %p129 = scmp.eq.s32.totalorder %s16, 15
      %p130 = por %p128, %p129
      %p131 = scmp.ne.s32.totalorder %s120, %s121
      %p132 = scmp.eq.s32.totalorder %s16, 0
      %p133 = por %p131, %p132
      %p134 = scmp.ne.s32.totalorder %s120, %s121
      %p135 = scmp.eq.s32.totalorder %s17, 15
      %p136 = por %p134, %p135
      %p138 = scmp.ne.s32.totalorder %s121, %s137
      %p139 = scmp.eq.s32.totalorder %s17, 0
      %p140 = por %p138, %p139
      %s141 = ssub.s32 %s18, %s30
      %s142 = ssub.s32 %s19, %s26
      %s143 = sor.u32 %s141, %s142
      %p144 = scmp.eq.s32.totalorder %s143, 0
      %s146 = sadd.s32 %s145, 1
      %s147 = scalar_select %p144, %s145, %s146
      %p150 = pneg %p144
      %p151 = scmp.eq.s32.totalorder %s11, 15
      %p152 = por %p150, %p151
      %p153 = scmp.ne.s32.totalorder %s145, %s148
      %p154 = scmp.eq.s32.totalorder %s11, 0
      %p155 = por %p153, %p154
      %p156 = scmp.ne.s32.totalorder %s145, %s148
      %p157 = scmp.eq.s32.totalorder %s16, 15
      %p158 = por %p156, %p157
      %p159 = scmp.ne.s32.totalorder %s148, %s149
      %p160 = scmp.eq.s32.totalorder %s16, 0
      %p161 = por %p159, %p160
      %p162 = scmp.ne.s32.totalorder %s148, %s149
      %p163 = scmp.eq.s32.totalorder %s17, 15
      %p164 = por %p162, %p163
      %p166 = scmp.ne.s32.totalorder %s149, %s165
      %p167 = scmp.eq.s32.totalorder %s17, 0
      %p168 = por %p166, %p167
      %p169 = scmp.le.s32.totalorder 1, %s11
      %p170 = scmp.lt.s32.totalorder %s11, 17
      %p171 = pnand %p169, %p170
      %p172 = pneg %p171
      // Predicated region
      $region9: #{upcna_forward.2} parent=5 // pred_check
        _
      $region10: #{upcna_forward.2} parent=5 // pred_check_branch
        %174 = sbr.rel (%p171) target = $region12
      $region11: #{upcna_forward.2} parent=5 // pred_region
        %s175 = ssub.s32 %s11, 1
      $region12: #{upcna_forward.2} parent=5 // pred_fallthru
        _
      %p176 = scmp.lt.s32.totalorder %s11, 16
      // Predicated region
      $region13: #{upcna_forward.2} parent=5 // pred_check
        %p177 = pneg %p176
      $region14: #{upcna_forward.2} parent=5 // pred_check_branch
        %179 = sbr.rel (%p177) target = $region16
      $region15: #{upcna_forward.2} parent=5 // pred_region
        // Predicated region
        $region17: #{upcna_forward.2} parent=15 // pred_check
          %p180 = pneg %p45
        $region18: #{upcna_forward.2} parent=15 // pred_check_branch
          %182 = sbr.rel (%p180) target = $region20
        $region19: #{upcna_forward.2} parent=15 // pred_region
          %s183 = sand.u32 %s35, 1
          %s184 = sand.u32 %s35, 1
          %s185 = smul.addr %s184, 64
          %s186 = scalar_lea.vmem [#allocation2], %s185
          %s187 = smul.u32 4, %s19
          %s188 = smul.addr %s18, 32
          %s189 = sadd.s32 %s187, %s188
          %s190 = smul.addr %s189, 4
          %s191 = scalar_lea.vmem %s0, %s190
          // Predicated region
          $region21: #{upcna_forward.2} parent=19 // pred_check
            _
          $region22: #{upcna_forward.2} parent=19 // pred_check_branch
            %193 = sbr.rel (0) target = $region24
          $region23: #{upcna_forward.2} parent=19 // pred_region
            // Predicated region
            $region25: #{upcna_forward.2} parent=23 // pred_check
              _
            $region26: #{upcna_forward.2} parent=23 // pred_check_branch
              %195 = sbr.rel (0) target = $region28
            $region27: #{upcna_forward.2} parent=23 // pred_region
              loop: start=0, step=1, limit=1
              $region29: #{upcna_forward.2} parent=27 // loop_pre_header
                _
              $region30: #{upcna_forward.2} parent=27 // loop_header
                %s197 = sphi 0, %s201
                %p198 = scmp.ge.s32.totalorder %s197, 1
                %s202 = sphi %s191, %s191
                %s203 = sphi %s186, %s186
              $region31: #{upcna_forward.2} parent=27 // loop_header_branch
                %200 = sbr.rel (%p198) target = $region35
              $region32: #{upcna_forward.2} parent=27 // loop_body
                %v204 = vld [vmem:[%s202] sm:$0xff]
                %205 = vst [vmem:[%s203] sm:$0xff] %v204
                %v206 = vld [vmem:[%s202 + $0x8] sm:$0xff]
                %207 = vst [vmem:[%s203 + $0x8] sm:$0xff] %v206
                %v208 = vld [vmem:[%s202 + $0x20] sm:$0xff]
                %209 = vst [vmem:[%s203 + $0x10] sm:$0xff] %v208
                %v210 = vld [vmem:[%s202 + $0x28] sm:$0xff]
                %211 = vst [vmem:[%s203 + $0x18] sm:$0xff] %v210
                %v212 = vld [vmem:[%s202 + $0x40] sm:$0xff]
                %213 = vst [vmem:[%s203 + $0x20] sm:$0xff] %v212
                %v214 = vld [vmem:[%s202 + $0x48] sm:$0xff]
                %215 = vst [vmem:[%s203 + $0x28] sm:$0xff] %v214
                %v216 = vld [vmem:[%s202 + $0x60] sm:$0xff]
                %217 = vst [vmem:[%s203 + $0x30] sm:$0xff] %v216
                %v218 = vld [vmem:[%s202 + $0x68] sm:$0xff]
                %219 = vst [vmem:[%s203 + $0x38] sm:$0xff] %v218
              $region33: #{upcna_forward.2} parent=27 // loop_footer
                %s201 = sadd.s32 1, %s197
              $region34: #{upcna_forward.2} parent=27 // loop_footer_branch
                %196 = sbr.rel target = $region30
              $region35: #{upcna_forward.2} parent=27 // loop_exit
                _
            $region28: #{upcna_forward.2} parent=23 // pred_fallthru
              _
            // Predicated region
            $region36: #{upcna_forward.2} parent=23 // pred_check
              _
            $region37: #{upcna_forward.2} parent=23 // pred_check_branch
              %221 = sbr.rel target = $region39
            $region38: #{upcna_forward.2} parent=23 // pred_region
              _
            $region39: #{upcna_forward.2} parent=23 // pred_fallthru
              _
          $region24: #{upcna_forward.2} parent=19 // pred_fallthru
            _
          %222 = vnop
        $region20: #{upcna_forward.2} parent=15 // pred_fallthru
          _
        // Predicated region
        $region40: #{upcna_forward.2} parent=15 // pred_check
          %p223 = pneg %p71
        $region41: #{upcna_forward.2} parent=15 // pred_check_branch
          %225 = sbr.rel (%p223) target = $region43
        $region42: #{upcna_forward.2} parent=15 // pred_region
          %p226 = scmp.lt.s32.totalorder %s18, 7
          %s227 = scalar_select %p226, %s18, 7
          %s228 = smul.addr %s227, 4
          %s229 = scalar_lea.vmem %s1, %s228
        $region43: #{upcna_forward.2} parent=15 // pred_fallthru
          _
      $region16: #{upcna_forward.2} parent=5 // pred_fallthru
        _
      %p230 = scmp.le.s32.totalorder 1, %s11
      %p231 = scmp.lt.s32.totalorder %s11, 17
      %p232 = pnand %p230, %p231
      %p233 = pneg %p232
      // Predicated region
      $region44: #{upcna_forward.2} parent=5 // pred_check
        _
      $region45: #{upcna_forward.2} parent=5 // pred_check_branch
        %235 = sbr.rel (%p232) target = $region47
      $region46: #{upcna_forward.2} parent=5 // pred_region
        %s236 = ssub.s32 %s11, 1
        %s237 = sand.u32 %s38, 1
        %s238 = sand.u32 %s38, 1
        %s239 = smul.addr %s238, 64
        %s240 = scalar_lea.vmem [#allocation2], %s239
        // Predicated region
        $region48: #{upcna_forward.2} parent=46 // pred_check
          %p241 = pneg %p51
        $region49: #{upcna_forward.2} parent=46 // pred_check_branch
          %243 = sbr.rel (%p241) target = $region51
        $region50: #{upcna_forward.2} parent=46 // pred_region
          _
        $region51: #{upcna_forward.2} parent=46 // pred_fallthru
          _
        %s244 = sand.u32 %s38, 1
        %s245 = sand.u32 %s38, 1
        %s246 = smul.addr %s245, 64
        %s247 = scalar_lea.vmem [#allocation2], %s246
        %p248 = pneg %p51
        %p249 = pneg %p48
        %p250 = scmp.lt.s32.totalorder %s20, 7
        %s251 = scalar_select %p250, %s20, 7
        %s252 = smul.addr %s251, 4
        %s253 = scalar_lea.vmem %s1, %s252
        %p254 = pneg %p77
        %p255 = pneg %p74
        %p256 = pneg %p105
        %p257 = pneg %p102
        %s258 = smul.u32 4, %s21
        %p259 = scmp.lt.s32.totalorder %s20, 7
        %s260 = scalar_select %p259, %s20, 7
        %p261 = scmp.lt.s32.totalorder %s258, 7
        %s262 = scalar_select %p261, %s258, 7
        %s263 = smul.addr %s260, 8
        %s264 = sadd.s32 %s262, %s263
        %s265 = smul.addr %s264, 8
        %s266 = scalar_lea.vmem %s2, %s265
        %p267 = pneg %p133
        %p268 = pneg %p130
        %p269 = scmp.lt.s32.totalorder %s20, 7
        %s270 = scalar_select %p269, %s20, 7
        %p271 = scmp.lt.s32.totalorder %s21, 1
        %s272 = scalar_select %p271, %s21, 1
        %s273 = smul.addr %s270, 2
        %s274 = sadd.s32 %s272, %s273
        %s275 = smul.addr %s274, 8
        %s276 = scalar_lea.vmem %s3, %s275
        %p277 = pneg %p161
        %p278 = pneg %p158
        %p279 = scmp.lt.s32.totalorder %s20, 7
        %s280 = scalar_select %p279, %s20, 7
        %p281 = scmp.lt.s32.totalorder %s21, 1
        %s282 = scalar_select %p281, %s21, 1
        %s283 = smul.addr %s280, 2
        %s284 = sadd.s32 %s282, %s283
        %s285 = smul.addr %s284, 8
        %s286 = scalar_lea.vmem %s4, %s285
        %s287 = smul.u32 4, %s21
        %p288 = scmp.lt.s32.totalorder %s20, 7
        %s289 = scalar_select %p288, %s20, 7
        %s290 = smul.addr %s289, 4
        %s291 = scalar_lea.vmem %s1, %s290
        %s292 = smul.u32 4, %s21
        %p293 = scmp.lt.s32.totalorder %s20, 7
        %s294 = scalar_select %p293, %s20, 7
        %p295 = scmp.lt.s32.totalorder %s292, 7
        %s296 = scalar_select %p295, %s292, 7
        %s297 = smul.addr %s294, 8
        %s298 = sadd.s32 %s296, %s297
        %s299 = smul.addr %s298, 8
        %s300 = scalar_lea.vmem %s2, %s299
        %s301 = smul.u32 4, %s21
        %p302 = scmp.lt.s32.totalorder %s20, 7
        %s303 = scalar_select %p302, %s20, 7
        %p304 = scmp.lt.s32.totalorder %s21, 1
        %s305 = scalar_select %p304, %s21, 1
        %s306 = smul.addr %s303, 2
        %s307 = sadd.s32 %s305, %s306
        %s308 = smul.addr %s307, 8
        %s309 = scalar_lea.vmem %s3, %s308
        %p310 = scmp.lt.s32.totalorder %s20, 7
        %s311 = scalar_select %p310, %s20, 7
        %p312 = scmp.lt.s32.totalorder %s21, 1
        %s313 = scalar_select %p312, %s21, 1
        %s314 = smul.addr %s311, 2
        %s315 = sadd.s32 %s313, %s314
        %s316 = smul.addr %s315, 8
        %s317 = scalar_lea.vmem %s4, %s316
        %v319 = vld [vmem:[%s291] sm:$0xf]
        %v320 = vld [vmem:[%s240] sm:$0xff]
        %v321 = vld [vmem:[%s240 + $0x8] sm:$0xff]
        %v322 = vld [vmem:[%s240 + $0x10] sm:$0xff]
        %v323 = vld [vmem:[%s240 + $0x18] sm:$0xff]
        %v324 = vld [vmem:[%s240 + $0x20] sm:$0xff]
        %v325 = vld [vmem:[%s240 + $0x28] sm:$0xff]
        %v326 = vld [vmem:[%s240 + $0x30] sm:$0xff]
        %v327 = vld [vmem:[%s240 + $0x38] sm:$0xff]
        %v336 = vunpack.c.l.b16 %v320
        %v337 = vunpack.c.h.b16 %v320
        %v338 = vunpack.c.l.b16 %v321
        %v339 = vunpack.c.h.b16 %v321
        %v340 = vunpack.c.l.b16 %v322
        %v341 = vunpack.c.h.b16 %v322
        %v342 = vunpack.c.l.b16 %v323
        %v343 = vunpack.c.h.b16 %v323
        %v344 = vunpack.c.l.b16 %v324
        %v345 = vunpack.c.h.b16 %v324
        %v346 = vunpack.c.l.b16 %v325
        %v347 = vunpack.c.h.b16 %v325
        %v348 = vunpack.c.l.b16 %v326
        %v349 = vunpack.c.h.b16 %v326
        %v350 = vunpack.c.l.b16 %v327
        %v351 = vunpack.c.h.b16 %v327
        %v352 = vpack.c.b16 %v340, %v336
        %v353 = vpack.c.b16 %v341, %v337
        %v354 = vpack.c.b16 %v342, %v338
        %v355 = vpack.c.b16 %v343, %v339
        %v356 = vpack.c.b16 %v348, %v344
        %v357 = vpack.c.b16 %v349, %v345
        %v358 = vpack.c.b16 %v350, %v346
        %v359 = vpack.c.b16 %v351, %v347
        %vm368 = vcmask 261120
        %v370 = vsel %vm368, %v319, 0
        %372 = vmatpush.bf16.msra.mxu0 0
        %373 = vmatpush.bf16.msra.mxu0 0
        %374 = vmatpush.bf16.msra.mxu0 0
        %375 = vmatpush.bf16.msra.mxu0 0
        %376 = vmatpush.bf16.msra.mxu0 0
        %377 = vmatpush.bf16.msra.mxu0 0
        %378 = vmatpush.bf16.msra.mxu0 %v356
        %379 = vmatpush.bf16.msra.mxu0 %v352
        %380 = vmatmul.bf16.gmra.mxu0 %v370
        %v381 = vpop.f32.mrf.mxu0
        %v382 = vadd.f32 0.0, %v381
        %v383 = vpop.f32.mrf.mxu0
        %384 = vdwg.mxu0
        %385 = vmatpush.bf16.msra.mxu0 0
        %386 = vmatpush.bf16.msra.mxu0 0
        %387 = vmatpush.bf16.msra.mxu0 0
        %388 = vmatpush.bf16.msra.mxu0 0
        %389 = vmatpush.bf16.msra.mxu0 0
        %390 = vmatpush.bf16.msra.mxu0 0
        %391 = vmatpush.bf16.msra.mxu0 %v357
        %392 = vmatpush.bf16.msra.mxu0 %v353
        %393 = vmatmul.bf16.gmra.mxu0 %v370
        %v394 = vpop.f32.mrf.mxu0
        %v395 = vadd.f32 0.0, %v394
        %v396 = vpop.f32.mrf.mxu0
        %397 = vdwg.mxu0
        %398 = vmatpush.bf16.msra.mxu0 0
        %399 = vmatpush.bf16.msra.mxu0 0
        %400 = vmatpush.bf16.msra.mxu0 0
        %401 = vmatpush.bf16.msra.mxu0 0
        %402 = vmatpush.bf16.msra.mxu0 0
        %403 = vmatpush.bf16.msra.mxu0 0
        %404 = vmatpush.bf16.msra.mxu0 %v358
        %405 = vmatpush.bf16.msra.mxu0 %v354
        %406 = vmatmul.bf16.gmra.mxu0 %v370
        %v407 = vpop.f32.mrf.mxu0
        %v408 = vadd.f32 0.0, %v407
        %v409 = vpop.f32.mrf.mxu0
        %410 = vdwg.mxu0
        %411 = vmatpush.bf16.msra.mxu0 0
        %412 = vmatpush.bf16.msra.mxu0 0
        %413 = vmatpush.bf16.msra.mxu0 0
        %414 = vmatpush.bf16.msra.mxu0 0
        %415 = vmatpush.bf16.msra.mxu0 0
        %416 = vmatpush.bf16.msra.mxu0 0
        %417 = vmatpush.bf16.msra.mxu0 %v359
        %418 = vmatpush.bf16.msra.mxu0 %v355
        %419 = vmatmul.bf16.gmra.mxu0 %v370
        %v420 = vpop.f32.mrf.mxu0
        %v421 = vadd.f32 0.0, %v420
        %v422 = vpop.f32.mrf.mxu0
        %423 = vdwg.mxu0
        %424 = vst [vmem:[%s300] sm:$0xff] %v382
        %425 = vst [vmem:[%s300 + $0x8] sm:$0xff] %v395
        %426 = vst [vmem:[%s300 + $0x10] sm:$0xff] %v408
        %427 = vst [vmem:[%s300 + $0x18] sm:$0xff] %v421
        %v428 = vadd.f32 %v382, %v395
        %v429 = vadd.f32 %v428, %v408
        %v430 = vadd.f32 %v429, %v421
        %431 = vadd.xlane.f32.xlu0 %v430
        %v432 = vpop.xlane.xlu0 %431
        %vm433 = vcmask 7168
        %434 = vst.msk [vmem:[%s309] sm:$0xff] %vm433, %v432
        %v435 = vmul.f32 %v382, %v382
        %v436 = vmul.f32 %v395, %v395
        %v437 = vmul.f32 %v408, %v408
        %v438 = vmul.f32 %v421, %v421
        %v439 = vadd.f32 %v435, %v436
        %v440 = vadd.f32 %v439, %v437
        %v441 = vadd.f32 %v440, %v438
        %442 = vadd.xlane.f32.xlu0 %v441
        %v443 = vpop.xlane.xlu0 %442
        %444 = vst.msk [vmem:[%s317] sm:$0xff] %vm433, %v443
        %s445 = smul.u32 4, %s21
        %p446 = scmp.lt.s32.totalorder %s20, 7
        %s447 = scalar_select %p446, %s20, 7
        %p448 = scmp.lt.s32.totalorder %s445, 7
        %s449 = scalar_select %p448, %s445, 7
        %s450 = smul.addr %s447, 8
        %s451 = sadd.s32 %s449, %s450
        %s452 = smul.addr %s451, 8
        %s453 = scalar_lea.vmem %s2, %s452
        %p454 = scmp.lt.s32.totalorder %s20, 7
        %s455 = scalar_select %p454, %s20, 7
        %p456 = scmp.lt.s32.totalorder %s21, 1
        %s457 = scalar_select %p456, %s21, 1
        %s458 = smul.addr %s455, 2
        %s459 = sadd.s32 %s457, %s458
        %s460 = smul.addr %s459, 8
        %s461 = scalar_lea.vmem %s3, %s460
        %p462 = scmp.lt.s32.totalorder %s20, 7
        %s463 = scalar_select %p462, %s20, 7
        %p464 = scmp.lt.s32.totalorder %s21, 1
        %s465 = scalar_select %p464, %s21, 1
        %s466 = smul.addr %s463, 2
        %s467 = sadd.s32 %s465, %s466
        %s468 = smul.addr %s467, 8
        %s469 = scalar_lea.vmem %s4, %s468
        // Predicated region
        $region52: #{upcna_forward.2} parent=46 // pred_check
          %p470 = pneg %p102
        $region53: #{upcna_forward.2} parent=46 // pred_check_branch
          %472 = sbr.rel (%p470) target = $region55
        $region54: #{upcna_forward.2} parent=46 // pred_region
          %s473 = smul.u32 4, %s21
        $region55: #{upcna_forward.2} parent=46 // pred_fallthru
          _
        // Predicated region
        $region56: #{upcna_forward.2} parent=46 // pred_check
          %p474 = pneg %p130
        $region57: #{upcna_forward.2} parent=46 // pred_check_branch
          %476 = sbr.rel (%p474) target = $region59
        $region58: #{upcna_forward.2} parent=46 // pred_region
          _
        $region59: #{upcna_forward.2} parent=46 // pred_fallthru
          _
        // Predicated region
        $region60: #{upcna_forward.2} parent=46 // pred_check
          %p477 = pneg %p158
        $region61: #{upcna_forward.2} parent=46 // pred_check_branch
          %479 = sbr.rel (%p477) target = $region63
        $region62: #{upcna_forward.2} parent=46 // pred_region
          _
        $region63: #{upcna_forward.2} parent=46 // pred_fallthru
          _
      $region47: #{upcna_forward.2} parent=5 // pred_fallthru
        _
      %p480 = scmp.le.s32.totalorder 2, %s11
      // Predicated region
      $region64: #{upcna_forward.2} parent=5 // pred_check
        %p481 = pneg %p480
      $region65: #{upcna_forward.2} parent=5 // pred_check_branch
        %483 = sbr.rel (%p481) target = $region67
      $region66: #{upcna_forward.2} parent=5 // pred_region
        %s484 = ssub.s32 %s11, 2
        // Predicated region
        $region68: #{upcna_forward.2} parent=66 // pred_check
          %p485 = pneg %p108
        $region69: #{upcna_forward.2} parent=66 // pred_check_branch
          %487 = sbr.rel (%p485) target = $region71
        $region70: #{upcna_forward.2} parent=66 // pred_region
          %s488 = smul.u32 4, %s23
          %p489 = scmp.lt.s32.totalorder %s22, 7
          %s490 = scalar_select %p489, %s22, 7
          %p491 = scmp.lt.s32.totalorder %s488, 7
          %s492 = scalar_select %p491, %s488, 7
          %s493 = smul.addr %s490, 8
          %s494 = sadd.s32 %s492, %s493
          %s495 = smul.addr %s494, 8
          %s496 = scalar_lea.vmem %s2, %s495
        $region71: #{upcna_forward.2} parent=66 // pred_fallthru
          _
        // Predicated region
        $region72: #{upcna_forward.2} parent=66 // pred_check
          %p497 = pneg %p136
        $region73: #{upcna_forward.2} parent=66 // pred_check_branch
          %499 = sbr.rel (%p497) target = $region75
        $region74: #{upcna_forward.2} parent=66 // pred_region
          %p500 = scmp.lt.s32.totalorder %s22, 7
          %s501 = scalar_select %p500, %s22, 7
          %p502 = scmp.lt.s32.totalorder %s23, 1
          %s503 = scalar_select %p502, %s23, 1
          %s504 = smul.addr %s501, 2
          %s505 = sadd.s32 %s503, %s504
          %s506 = smul.addr %s505, 8
          %s507 = scalar_lea.vmem %s3, %s506
        $region75: #{upcna_forward.2} parent=66 // pred_fallthru
          _
        // Predicated region
        $region76: #{upcna_forward.2} parent=66 // pred_check
          %p508 = pneg %p164
        $region77: #{upcna_forward.2} parent=66 // pred_check_branch
          %510 = sbr.rel (%p508) target = $region79
        $region78: #{upcna_forward.2} parent=66 // pred_region
          %p511 = scmp.lt.s32.totalorder %s22, 7
          %s512 = scalar_select %p511, %s22, 7
          %p513 = scmp.lt.s32.totalorder %s23, 1
          %s514 = scalar_select %p513, %s23, 1
          %s515 = smul.addr %s512, 2
          %s516 = sadd.s32 %s514, %s515
          %s517 = smul.addr %s516, 8
          %s518 = scalar_lea.vmem %s4, %s517
        $region79: #{upcna_forward.2} parent=66 // pred_fallthru
          _
      $region67: #{upcna_forward.2} parent=5 // pred_fallthru
        _
    $region6: #{upcna_forward.2} parent=1 // loop_footer
      %s15 = sadd.s32 1, %s11
    $region7: #{upcna_forward.2} parent=1 // loop_footer_branch
      %10 = sbr.rel target = $region3
    $region8: #{upcna_forward.2} parent=1 // loop_exit
      _

// kernel: upcna_forward.3
$region0: #{upcna_forward.3}
  #allocation0 [shape = 'u32[]', space=smem, size = 0x4, offset = 0x4, fixed_abs, tag = 'smem constant byte address 0x4 - core index']
  #allocation1 [shape = 'u32[72,128]{1,0:T(1,128)}', space=vmem, size = 0x9000, scoped, tag = 'internal scratch']
  %s0 = inlined_call_operand.vmem [shape: f32[8,8,1024], index: 0, kind: input, shape index: {}]
  %s1 = inlined_call_operand.vmem [shape: f32[8,1], index: 1, kind: input, shape index: {}]
  %s2 = inlined_call_operand.vmem [shape: f32[8,1], index: 2, kind: input, shape index: {}]
  %s3 = inlined_call_operand.vmem [shape: f32[8,8,1024], index: 3, kind: output, shape index: {}]
  %s4 = sld [smem:[#allocation0]]
  $region45: #{upcna_forward.3} parent=0
    _
  %s6 = ssub.s32 1, %s4
  %s7 = scalar_select 0, %s6, %s4
  loop: start=0, step=1, limit=18
  $region2: #{upcna_forward.3} parent=0 // loop_pre_header
    _
  $region3: #{upcna_forward.3} parent=0 // loop_header
    %s9 = sphi 0, %s13
    %p10 = scmp.ge.s32.totalorder %s9, 18
    %s16 = sphi 0, %s28
    %s17 = sphi 0, %s24
    %s18 = sphi 0, %s16
    %s19 = sphi 0, %s17
    %s20 = sphi 0, %s18
    %s21 = sphi 0, %s19
    %s33 = sphi 0, %s35
    %s36 = sphi 0, %s33
    %s37 = sphi 0, %s36
    %s53 = sphi 0, %s37
    %s57 = sphi 0, %s57
    %s59 = sphi 0, %s57
    %s60 = sphi 0, %s59
    %s74 = sphi 0, %s60
    %s78 = sphi 0, %s78
    %s80 = sphi 0, %s78
    %s81 = sphi 0, %s80
    %s95 = sphi 0, %s81
    %s103 = sphi 0, %s105
    %s106 = sphi 0, %s103
    %s107 = sphi 0, %s106
    %s123 = sphi 0, %s107
  $region4: #{upcna_forward.3} parent=0 // loop_header_branch
    %12 = sbr.rel (%p10) target = $region8
  $region5: #{upcna_forward.3} parent=0 // loop_body
    %s14 = ssub.s32 %s9, 1
    %s15 = ssub.s32 %s9, 2
    %s22 = sadd.s32 1, %s17
    %p23 = scmp.ge.s32.totalorder %s22, 2
    %s24 = scalar_select %p23, 0, %s22
    %s25 = sadd.s32 1, %s16
    %s26 = scalar_select %p23, %s25, %s16
    %p27 = scmp.ge.s32.totalorder %s26, 8
    %s28 = scalar_select %p27, 0, %s26
    %s29 = ssub.s32 %s16, %s28
    %s30 = ssub.s32 %s17, %s24
    %s31 = sor.u32 %s29, %s30
    %p32 = scmp.eq.s32.totalorder %s31, 0
    %s34 = sadd.s32 %s33, 1
    %s35 = scalar_select %p32, %s33, %s34
    %p38 = pneg %p32
    %p39 = scmp.eq.s32.totalorder %s9, 15
    %p40 = por %p38, %p39
    %p41 = scmp.ne.s32.totalorder %s33, %s36
    %p42 = scmp.eq.s32.totalorder %s9, 0
    %p43 = por %p41, %p42
    %p44 = scmp.ne.s32.totalorder %s33, %s36
    %p45 = scmp.eq.s32.totalorder %s14, 15
    %p46 = por %p44, %p45
    %p47 = scmp.ne.s32.totalorder %s36, %s37
    %p48 = scmp.eq.s32.totalorder %s14, 0
    %p49 = por %p47, %p48
    %p50 = scmp.ne.s32.totalorder %s36, %s37
    %p51 = scmp.eq.s32.totalorder %s15, 15
    %p52 = por %p50, %p51
    %p54 = scmp.ne.s32.totalorder %s37, %s53
    %p55 = scmp.eq.s32.totalorder %s15, 0
    %p56 = por %p54, %p55
    %s58 = sadd.s32 %s57, 1
    %p61 = scmp.eq.s32.totalorder %s9, 15
    %p62 = scmp.ne.s32.totalorder %s57, %s59
    %p63 = scmp.eq.s32.totalorder %s9, 0
    %p64 = por %p62, %p63
    %p65 = scmp.ne.s32.totalorder %s57, %s59
    %p66 = scmp.eq.s32.totalorder %s14, 15
    %p67 = por %p65, %p66
    %p68 = scmp.ne.s32.totalorder %s59, %s60
    %p69 = scmp.eq.s32.totalorder %s14, 0
    %p70 = por %p68, %p69
    %p71 = scmp.ne.s32.totalorder %s59, %s60
    %p72 = scmp.eq.s32.totalorder %s15, 15
    %p73 = por %p71, %p72
    %p75 = scmp.ne.s32.totalorder %s60, %s74
    %p76 = scmp.eq.s32.totalorder %s15, 0
    %p77 = por %p75, %p76
    %s79 = sadd.s32 %s78, 1
    %p82 = scmp.eq.s32.totalorder %s9, 15
    %p83 = scmp.ne.s32.totalorder %s78, %s80
    %p84 = scmp.eq.s32.totalorder %s9, 0
    %p85 = por %p83, %p84
    %p86 = scmp.ne.s32.totalorder %s78, %s80
    %p87 = scmp.eq.s32.totalorder %s14, 15
    %p88 = por %p86, %p87
    %p89 = scmp.ne.s32.totalorder %s80, %s81
    %p90 = scmp.eq.s32.totalorder %s14, 0
    %p91 = por %p89, %p90
    %p92 = scmp.ne.s32.totalorder %s80, %s81
    %p93 = scmp.eq.s32.totalorder %s15, 15
    %p94 = por %p92, %p93
    %p96 = scmp.ne.s32.totalorder %s81, %s95
    %p97 = scmp.eq.s32.totalorder %s15, 0
    %p98 = por %p96, %p97
    %s99 = ssub.s32 %s16, %s28
    %s100 = ssub.s32 %s17, %s24
    %s101 = sor.u32 %s99, %s100
    %p102 = scmp.eq.s32.totalorder %s101, 0
    %s104 = sadd.s32 %s103, 1
    %s105 = scalar_select %p102, %s103, %s104
    %p108 = pneg %p102
    %p109 = scmp.eq.s32.totalorder %s9, 15
    %p110 = por %p108, %p109
    %p111 = scmp.ne.s32.totalorder %s103, %s106
    %p112 = scmp.eq.s32.totalorder %s9, 0
    %p113 = por %p111, %p112
    %p114 = scmp.ne.s32.totalorder %s103, %s106
    %p115 = scmp.eq.s32.totalorder %s14, 15
    %p116 = por %p114, %p115
    %p117 = scmp.ne.s32.totalorder %s106, %s107
    %p118 = scmp.eq.s32.totalorder %s14, 0
    %p119 = por %p117, %p118
    %p120 = scmp.ne.s32.totalorder %s106, %s107
    %p121 = scmp.eq.s32.totalorder %s15, 15
    %p122 = por %p120, %p121
    %p124 = scmp.ne.s32.totalorder %s107, %s123
    %p125 = scmp.eq.s32.totalorder %s15, 0
    %p126 = por %p124, %p125
    %p127 = scmp.le.s32.totalorder 1, %s9
    %p128 = scmp.lt.s32.totalorder %s9, 17
    %p129 = pnand %p127, %p128
    %p130 = pneg %p129
    // Predicated region
    $region9: #{upcna_forward.3} parent=5 // pred_check
      _
    $region10: #{upcna_forward.3} parent=5 // pred_check_branch
      %132 = sbr.rel (%p129) target = $region12
    $region11: #{upcna_forward.3} parent=5 // pred_region
      %s133 = ssub.s32 %s9, 1
      // Predicated region
      $region13: #{upcna_forward.3} parent=11 // pred_check
        %p134 = pneg %p70
      $region14: #{upcna_forward.3} parent=11 // pred_check_branch
        %136 = sbr.rel (%p134) target = $region16
      $region15: #{upcna_forward.3} parent=11 // pred_region
        _
      $region16: #{upcna_forward.3} parent=11 // pred_fallthru
        _
      // Predicated region
      $region17: #{upcna_forward.3} parent=11 // pred_check
        %p137 = pneg %p91
      $region18: #{upcna_forward.3} parent=11 // pred_check_branch
        %139 = sbr.rel (%p137) target = $region20
      $region19: #{upcna_forward.3} parent=11 // pred_region
        _
      $region20: #{upcna_forward.3} parent=11 // pred_fallthru
        _
    $region12: #{upcna_forward.3} parent=5 // pred_fallthru
      _
    %p140 = scmp.lt.s32.totalorder %s9, 16
    // Predicated region
    $region21: #{upcna_forward.3} parent=5 // pred_check
      %p141 = pneg %p140
    $region22: #{upcna_forward.3} parent=5 // pred_check_branch
      %143 = sbr.rel (%p141) target = $region24
    $region23: #{upcna_forward.3} parent=5 // pred_region
      // Predicated region
      $region25: #{upcna_forward.3} parent=23 // pred_check
        %p144 = pneg %p43
      $region26: #{upcna_forward.3} parent=23 // pred_check_branch
        %146 = sbr.rel (%p144) target = $region28
      $region27: #{upcna_forward.3} parent=23 // pred_region
        %s147 = smul.u32 4, %s17
        %p148 = scmp.lt.s32.totalorder %s16, 7
        %s149 = scalar_select %p148, %s16, 7
        %p150 = scmp.lt.s32.totalorder %s147, 7
        %s151 = scalar_select %p150, %s147, 7
        %s152 = smul.addr %s149, 8
        %s153 = sadd.s32 %s151, %s152
        %s154 = smul.addr %s153, 8
        %s155 = scalar_lea.vmem %s0, %s154
        %s156 = smul.u32 4, %s17
      $region28: #{upcna_forward.3} parent=23 // pred_fallthru
        _
    $region24: #{upcna_forward.3} parent=5 // pred_fallthru
      _
    %p157 = scmp.le.s32.totalorder 1, %s9
    %p158 = scmp.lt.s32.totalorder %s9, 17
    %p159 = pnand %p157, %p158
    %p160 = pneg %p159
    // Predicated region
    $region29: #{upcna_forward.3} parent=5 // pred_check
      _
    $region30: #{upcna_forward.3} parent=5 // pred_check_branch
      %162 = sbr.rel (%p159) target = $region32
    $region31: #{upcna_forward.3} parent=5 // pred_region
      %s163 = ssub.s32 %s9, 1
      %s164 = smul.u32 4, %s19
      %p165 = scmp.lt.s32.totalorder %s18, 7
      %s166 = scalar_select %p165, %s18, 7
      %p167 = scmp.lt.s32.totalorder %s164, 7
      %s168 = scalar_select %p167, %s164, 7
      %s169 = smul.addr %s166, 8
      %s170 = sadd.s32 %s168, %s169
      %s171 = smul.addr %s170, 8
      %s172 = scalar_lea.vmem %s0, %s171
      %p173 = pneg %p49
      %p174 = pneg %p46
      %p175 = pneg %p70
      %p176 = pneg %p67
      %p177 = pneg %p91
      %p178 = pneg %p88
      %p179 = pneg %p119
      %p180 = pneg %p116
      %s181 = smul.u32 4, %s19
      %p182 = scmp.lt.s32.totalorder %s18, 7
      %s183 = scalar_select %p182, %s18, 7
      %p184 = scmp.lt.s32.totalorder %s181, 7
      %s185 = scalar_select %p184, %s181, 7
      %s186 = smul.addr %s183, 8
      %s187 = sadd.s32 %s185, %s186
      %s188 = smul.addr %s187, 8
      %s189 = scalar_lea.vmem %s3, %s188
      %s190 = smul.u32 4, %s19
      %p191 = scmp.lt.s32.totalorder %s18, 7
      %s192 = scalar_select %p191, %s18, 7
      %p193 = scmp.lt.s32.totalorder %s190, 7
      %s194 = scalar_select %p193, %s190, 7
      %s195 = smul.addr %s192, 8
      %s196 = sadd.s32 %s194, %s195
      %s197 = smul.addr %s196, 8
      %s198 = scalar_lea.vmem %s0, %s197
      %s199 = smul.u32 4, %s19
      %s200 = smul.u32 4, %s19
      %p201 = scmp.lt.s32.totalorder %s18, 7
      %s202 = scalar_select %p201, %s18, 7
      %p203 = scmp.lt.s32.totalorder %s200, 7
      %s204 = scalar_select %p203, %s200, 7
      %s205 = smul.addr %s202, 8
      %s206 = sadd.s32 %s204, %s205
      %s207 = smul.addr %s206, 8
      %s208 = scalar_lea.vmem %s3, %s207
      %s209 = smul.u32 4, %s19
      %v210 = vld [vmem:[%s198] sm:$0xff]
      %v211 = vld [vmem:[%s198 + $0x8] sm:$0xff]
      %v212 = vld [vmem:[%s198 + $0x10] sm:$0xff]
      %v213 = vld [vmem:[%s198 + $0x18] sm:$0xff]
      %v214 = vld [vmem:[%s1] sm:$0xff]
      %216 = vset.pattern.permute.xlu0 0
      %217 = vperm.xlu0 %216, %v214
      %v218 = vpop.permute.xlu0 %217
      %v220 = vmul.f32 %v210, %v218
      %v221 = vmul.f32 %v211, %v218
      %v222 = vmul.f32 %v212, %v218
      %v223 = vmul.f32 %v213, %v218
      %v224 = vld [vmem:[%s2] sm:$0xff]
      %226 = vset.pattern.permute.xlu0 0
      %227 = vperm.xlu0 %226, %v224
      %v228 = vpop.permute.xlu0 %227
      %v230 = vadd.f32 %v220, %v228
      %v231 = vadd.f32 %v221, %v228
      %v232 = vadd.f32 %v222, %v228
      %v233 = vadd.f32 %v223, %v228
      %v234 = vmax.f32 %v230, 0.0
      %v235 = vmax.f32 %v231, 0.0
      %v236 = vmax.f32 %v232, 0.0
      %v237 = vmax.f32 %v233, 0.0
      %238 = vst [vmem:[%s208] sm:$0xff] %v234
      %239 = vst [vmem:[%s208 + $0x8] sm:$0xff] %v235
      %240 = vst [vmem:[%s208 + $0x10] sm:$0xff] %v236
      %241 = vst [vmem:[%s208 + $0x18] sm:$0xff] %v237
      %s242 = smul.u32 4, %s19
      %p243 = scmp.lt.s32.totalorder %s18, 7
      %s244 = scalar_select %p243, %s18, 7
      %p245 = scmp.lt.s32.totalorder %s242, 7
      %s246 = scalar_select %p245, %s242, 7
      %s247 = smul.addr %s244, 8
      %s248 = sadd.s32 %s246, %s247
      %s249 = smul.addr %s248, 8
      %s250 = scalar_lea.vmem %s3, %s249
      // Predicated region
      $region33: #{upcna_forward.3} parent=31 // pred_check
        %p251 = pneg %p116
      $region34: #{upcna_forward.3} parent=31 // pred_check_branch
        %253 = sbr.rel (%p251) target = $region36
      $region35: #{upcna_forward.3} parent=31 // pred_region
        %s254 = smul.u32 4, %s19
      $region36: #{upcna_forward.3} parent=31 // pred_fallthru
        _
    $region32: #{upcna_forward.3} parent=5 // pred_fallthru
      _
    %p255 = scmp.le.s32.totalorder 2, %s9
    // Predicated region
    $region37: #{upcna_forward.3} parent=5 // pred_check
      %p256 = pneg %p255
    $region38: #{upcna_forward.3} parent=5 // pred_check_branch
      %258 = sbr.rel (%p256) target = $region40
    $region39: #{upcna_forward.3} parent=5 // pred_region
      %s259 = ssub.s32 %s9, 2
      // Predicated region
      $region41: #{upcna_forward.3} parent=39 // pred_check
        %p260 = pneg %p122
      $region42: #{upcna_forward.3} parent=39 // pred_check_branch
        %262 = sbr.rel (%p260) target = $region44
      $region43: #{upcna_forward.3} parent=39 // pred_region
        %s263 = smul.u32 4, %s21
        %p264 = scmp.lt.s32.totalorder %s20, 7
        %s265 = scalar_select %p264, %s20, 7
        %p266 = scmp.lt.s32.totalorder %s263, 7
        %s267 = scalar_select %p266, %s263, 7
        %s268 = smul.addr %s265, 8
        %s269 = sadd.s32 %s267, %s268
        %s270 = smul.addr %s269, 8
        %s271 = scalar_lea.vmem %s3, %s270
      $region44: #{upcna_forward.3} parent=39 // pred_fallthru
        _
    $region40: #{upcna_forward.3} parent=5 // pred_fallthru
      _
  $region6: #{upcna_forward.3} parent=0 // loop_footer
    %s13 = sadd.s32 1, %s9
  $region7: #{upcna_forward.3} parent=0 // loop_footer_branch
    %8 = sbr.rel target = $region3
  $region8: #{upcna_forward.3} parent=0 // loop_exit
    _

</llo_original>
